<compile_context>
chip_gen: v6e
topology: v6e:2x2x1
jax: 0.10.0
libtpu: 0.0.40
codegen_flags: <defaults>
</compile_context>

<pallas_src>
import functools

import jax
import jax.numpy as jnp
from jax.experimental import pallas as pl
from jax.experimental.pallas import tpu as pltpu

BN_EPS = 1e-5
# Scoped-VMEM budget; small for the demo, and safe on v5e (128 MiB phys),
# v6e (128 MiB phys) and v7x (64 MiB phys, 32 MiB default scoped).
_VMEM_LIMIT_BYTES = 32 * 1024 * 1024


def _layer1_stats_kernel(x_ref, w1_ref, b1_ref, h_ref, sum_ref, ssq_ref, *,
                         n_valid, n_padded):
    """Pass 1: h = x @ W1 + b1 for one batch tile (MXU, f32 accumulate), plus
    per-feature sum / sum-of-squares accumulated across all batch tiles for
    full-batch BatchNorm statistics (padded rows masked out)."""
    i = pl.program_id(0)

    @pl.when(i == 0)
    def _():
        sum_ref[...] = jnp.zeros_like(sum_ref)
        ssq_ref[...] = jnp.zeros_like(ssq_ref)

    # Matmul operands stay in their native dtype (e.g. bf16) -> MXU peak;
    # accumulate in f32.
    h = jnp.dot(x_ref[...], w1_ref[...], preferred_element_type=jnp.float32)
    h = h + b1_ref[...].astype(jnp.float32)
    h_ref[...] = h

    if n_valid == n_padded:
        # No padded rows -> skip the mask entirely (static decision).
        hm = h
    else:
        # Mask padded batch rows out of the statistics (divide by true N later).
        tm = h.shape[0]
        row = jax.lax.broadcasted_iota(jnp.int32, (tm, 1), 0) + i * tm
        hm = jnp.where(row < n_valid, h, 0.0)
    sum_ref[...] += jnp.sum(hm, axis=0, keepdims=True)
    ssq_ref[...] += jnp.sum(hm * hm, axis=0, keepdims=True)


def _bn_relu_layer2_kernel(h_ref, scale_ref, shift_ref, w2_ref, b2_ref, o_ref):
    """Pass 2: y = relu(h * scale + shift) @ W2 + b2, with the BatchNorm affine
    pre-folded into per-feature scale/shift (f32 VPU ops, MXU matmul)."""
    a = jnp.maximum(h_ref[...] * scale_ref[...] + shift_ref[...], 0.0)
    y = jnp.dot(a.astype(w2_ref.dtype), w2_ref[...],
                preferred_element_type=jnp.float32)
    o_ref[...] = (y + b2_ref[...].astype(jnp.float32)).astype(o_ref.dtype)


def _round_up(v, m):
    return (v + m - 1) // m * m


@functools.partial(jax.jit, static_argnames=("block_rows",))
def prediction_mlp(x, w1, b1, gamma, beta, w2, b2, *, block_rows=256):
    """Forward pass of prediction_MLP with training-mode BatchNorm1d."""
    n, in_dim = x.shape
    hidden = w1.shape[1]
    out_dim = w2.shape[1]
    f32 = jnp.float32

    # Lane-dense (multiple-of-128) feature dims, sublane-aligned batch tile.
    d_in = _round_up(in_dim, 128)
    d_h = _round_up(hidden, 128)
    d_out = _round_up(out_dim, 128)
    tm = min(block_rows, _round_up(n, 16))
    n_pad = _round_up(n, tm)
    grid = (n_pad // tm,)

    # Zero-pad everything: padded rows/cols contribute nothing and are masked /
    # sliced away; padded BN features get scale=0/shift=0 from sum=sumsq=0 and
    # gamma_pad=0, so they stay exactly zero through ReLU and the 2nd matmul.
    xp = jnp.pad(x, ((0, n_pad - n), (0, d_in - in_dim)))
    w1p = jnp.pad(w1, ((0, d_in - in_dim), (0, d_h - hidden)))
    b1p = jnp.pad(b1.reshape(1, -1).astype(f32), ((0, 0), (0, d_h - hidden)))
    gp = jnp.pad(gamma.reshape(1, -1).astype(f32), ((0, 0), (0, d_h - hidden)))
    bp = jnp.pad(beta.reshape(1, -1).astype(f32), ((0, 0), (0, d_h - hidden)))
    w2p = jnp.pad(w2, ((0, d_h - hidden), (0, d_out - out_dim)))
    b2p = jnp.pad(b2.reshape(1, -1).astype(f32), ((0, 0), (0, d_out - out_dim)))

    x_bytes = x.dtype.itemsize
    w_bytes = w1p.dtype.itemsize

    # ---------------- pass 1: h = x @ W1 + b1, batch statistics ----------------
    cost1 = pl.CostEstimate(
        flops=2 * n_pad * d_in * d_h,
        transcendentals=0,
        bytes_accessed=(n_pad * d_in * x_bytes + d_in * d_h * w_bytes
                        + n_pad * d_h * 4 + 3 * d_h * 4),
    )
    h, s, ssq = pl.pallas_call(
        functools.partial(_layer1_stats_kernel, n_valid=n, n_padded=n_pad),
        grid=grid,
        in_specs=[
            pl.BlockSpec((tm, d_in), lambda i: (i, 0)),     # x tile (pipelined)
            pl.BlockSpec((d_in, d_h), lambda i: (0, 0)),    # W1 resident in VMEM
            pl.BlockSpec((1, d_h), lambda i: (0, 0)),       # b1 resident
        ],
        out_specs=[
            pl.BlockSpec((tm, d_h), lambda i: (i, 0)),      # h tile
            pl.BlockSpec((1, d_h), lambda i: (0, 0)),       # sum accumulator
            pl.BlockSpec((1, d_h), lambda i: (0, 0)),       # sum-of-squares acc
        ],
        out_shape=[
            jax.ShapeDtypeStruct((n_pad, d_h), f32),
            jax.ShapeDtypeStruct((1, d_h), f32),
            jax.ShapeDtypeStruct((1, d_h), f32),
        ],
        compiler_params=pltpu.CompilerParams(
            # Stats accumulate across the batch-tile axis -> must be arbitrary.
            dimension_semantics=("arbitrary",),
            vmem_limit_bytes=_VMEM_LIMIT_BYTES,
        ),
        cost_estimate=cost1,
    )(xp, w1p, b1p)

    # ---- full-batch BatchNorm1d (training mode, biased variance) folded into a
    #      per-feature scale/shift; tiny (1, H) f32 math stays in plain JAX. ----
    mean = s / n
    var = jnp.maximum(ssq / n - mean * mean, 0.0)
    inv_std = jax.lax.rsqrt(var + BN_EPS)
    scale = gp * inv_std
    shift = bp - mean * scale

    # ---------------- pass 2: y = relu(h*scale + shift) @ W2 + b2 ---------------
    cost2 = pl.CostEstimate(
        flops=2 * n_pad * d_h * d_out,
        transcendentals=0,
        bytes_accessed=(n_pad * d_h * 4 + d_h * d_out * w_bytes
                        + n_pad * d_out * x_bytes + 2 * d_h * 4 + d_out * 4),
    )
    y = pl.pallas_call(
        _bn_relu_layer2_kernel,
        grid=grid,
        in_specs=[
            pl.BlockSpec((tm, d_h), lambda i: (i, 0)),      # h tile (pipelined)
            pl.BlockSpec((1, d_h), lambda i: (0, 0)),       # folded BN scale
            pl.BlockSpec((1, d_h), lambda i: (0, 0)),       # folded BN shift
            pl.BlockSpec((d_h, d_out), lambda i: (0, 0)),   # W2 resident
            pl.BlockSpec((1, d_out), lambda i: (0, 0)),     # b2 resident
        ],
        out_specs=pl.BlockSpec((tm, d_out), lambda i: (i, 0)),
        out_shape=jax.ShapeDtypeStruct((n_pad, d_out), x.dtype),
        compiler_params=pltpu.CompilerParams(
            # Tiles are independent here -> shard across TensorCores.
            dimension_semantics=("parallel",),
            vmem_limit_bytes=_VMEM_LIMIT_BYTES,
        ),
        cost_estimate=cost2,
    )(h, scale, shift, w2p, b2p)

    return y[:n, :out_dim]


def reference_forward(x, w1, b1, gamma, beta, w2, b2):
    """Pure-JAX reference mirroring the kernel math (bf16 operands, f32 accum)."""
    h = jnp.dot(x, w1, preferred_element_type=jnp.float32) + b1.astype(jnp.float32)
    mean = jnp.mean(h, axis=0, keepdims=True)
    var = jnp.mean((h - mean) ** 2, axis=0, keepdims=True)
    hn = (h - mean) * jax.lax.rsqrt(var + BN_EPS)
    a = jnp.maximum(hn * gamma + beta, 0.0)
    return jnp.dot(a.astype(w2.dtype), w2, preferred_element_type=jnp.float32) + b2


if __name__ == "__main__":
    # Small shapes consistent with the module's bottleneck (in -> hidden -> out).
    # Deliberately NOT multiples of 128 / of the batch tile so the padding and
    # masked-BN-statistics paths are exercised (2 batch tiles, 2nd one partial).
    N, in_dim, hidden_dim, out_dim = 50, 96, 48, 80

    key = jax.random.PRNGKey(0)
    kx, kw1, kb1, kw2, kb2 = jax.random.split(key, 5)

    # bf16 matmul operands (MXU-friendly), f32 biases / BN parameters.
    x = jax.random.normal(kx, (N, in_dim), jnp.float32).astype(jnp.bfloat16)

    bound1 = 1.0 / (in_dim ** 0.5)
    w1 = jax.random.uniform(kw1, (in_dim, hidden_dim), jnp.float32,
                            -bound1, bound1).astype(jnp.bfloat16)
    b1 = jax.random.uniform(kb1, (hidden_dim,), jnp.float32, -bound1, bound1)
    gamma = jnp.ones((hidden_dim,), jnp.float32)   # BatchNorm1d weight
    beta = jnp.zeros((hidden_dim,), jnp.float32)   # BatchNorm1d bias

    bound2 = 1.0 / (hidden_dim ** 0.5)
    w2 = jax.random.uniform(kw2, (hidden_dim, out_dim), jnp.float32,
                            -bound2, bound2).astype(jnp.bfloat16)
    b2 = jax.random.uniform(kb2, (out_dim,), jnp.float32, -bound2, bound2)

    out = prediction_mlp(x, w1, b1, gamma, beta, w2, b2, block_rows=32)
    out = jax.block_until_ready(out)

    ref = reference_forward(x, w1, b1.reshape(1, -1), gamma.reshape(1, -1),
                            beta.reshape(1, -1), w2, b2.reshape(1, -1))
    assert out.shape == (N, out_dim)
    assert jnp.allclose(out.astype(jnp.float32), ref, atol=2e-2, rtol=2e-2), \
        "mismatch vs reference"

    print("KERNEL_OK")
</pallas_src>

<mosaic_0001>
module attributes {stable_mosaic.version = 11 : i64} {
  func.func @_bn_relu_layer2_kernel(%arg0: i32, %arg1: memref<32x128xf32, #tpu.memory_space<vmem>>, %arg2: memref<1x128xf32, #tpu.memory_space<vmem>>, %arg3: memref<1x128xf32, #tpu.memory_space<vmem>>, %arg4: memref<128x128xbf16, #tpu.memory_space<vmem>>, %arg5: memref<1x128xf32, #tpu.memory_space<vmem>>, %arg6: memref<32x128xbf16, #tpu.memory_space<vmem>>) attributes {dimension_semantics = [#tpu.dimension_semantics<parallel>], iteration_bounds = array<i64: 2>, scalar_prefetch = 0 : i64, scratch_operands = 0 : i64, tpu.core_type = #tpu.core_type<tc>, window_params = [{transform_indices = @transform_0, window_bounds = array<i64: 32, 128>}, {pipeline_mode = #tpu.pipeline_mode<synchronous>, transform_indices = @transform_1, window_bounds = array<i64: 1, 128>}, {pipeline_mode = #tpu.pipeline_mode<synchronous>, transform_indices = @transform_2, window_bounds = array<i64: 1, 128>}, {pipeline_mode = #tpu.pipeline_mode<synchronous>, transform_indices = @transform_3, window_bounds = array<i64: 128, 128>}, {pipeline_mode = #tpu.pipeline_mode<synchronous>, transform_indices = @transform_4, window_bounds = array<i64: 1, 128>}, {transform_indices = @transform_5, window_bounds = array<i64: 32, 128>}]} {
    %c0 = arith.constant 0 : index
    %c0_0 = arith.constant 0 : index
    %0 = vector.load %arg1[%c0, %c0_0] : memref<32x128xf32, #tpu.memory_space<vmem>>, vector<32x128xf32>
    %c0_1 = arith.constant 0 : index
    %c0_2 = arith.constant 0 : index
    %1 = vector.load %arg2[%c0_1, %c0_2] : memref<1x128xf32, #tpu.memory_space<vmem>>, vector<1x128xf32>
    %2 = vector.broadcast %1 : vector<1x128xf32> to vector<32x128xf32>
    %3 = arith.mulf %0, %2 : vector<32x128xf32>
    %c0_3 = arith.constant 0 : index
    %c0_4 = arith.constant 0 : index
    %4 = vector.load %arg3[%c0_3, %c0_4] : memref<1x128xf32, #tpu.memory_space<vmem>>, vector<1x128xf32>
    %5 = vector.broadcast %4 : vector<1x128xf32> to vector<32x128xf32>
    %6 = arith.addf %3, %5 : vector<32x128xf32>
    %cst = arith.constant 0.000000e+00 : f32
    %7 = vector.broadcast %cst : f32 to vector<32x128xf32>
    %8 = arith.maximumf %6, %7 : vector<32x128xf32>
    %9 = arith.truncf %8 : vector<32x128xf32> to vector<32x128xbf16>
    %c0_5 = arith.constant 0 : index
    %c0_6 = arith.constant 0 : index
    %10 = vector.load %arg4[%c0_5, %c0_6] : memref<128x128xbf16, #tpu.memory_space<vmem>>, vector<128x128xbf16>
    %cst_7 = arith.constant dense<0.000000e+00> : vector<32x128xf32>
    %11 = tpu.matmul %9, %10, %cst_7 {dimension_numbers = #tpu.dot_dimension_numbers<[1], [0], [0], [1], [0, 0, 1, 1], [], []>} : vector<32x128xbf16>, vector<128x128xbf16>, vector<32x128xf32> -> vector<32x128xf32>
    %c0_8 = arith.constant 0 : index
    %c0_9 = arith.constant 0 : index
    %12 = vector.load %arg5[%c0_8, %c0_9] : memref<1x128xf32, #tpu.memory_space<vmem>>, vector<1x128xf32>
    %13 = vector.broadcast %12 : vector<1x128xf32> to vector<32x128xf32>
    %14 = arith.addf %11, %13 : vector<32x128xf32>
    %15 = arith.truncf %14 : vector<32x128xf32> to vector<32x128xbf16>
    %c0_10 = arith.constant 0 : index
    %c0_11 = arith.constant 0 : index
    %16 = vector.load %arg6[%c0_10, %c0_11] : memref<32x128xbf16, #tpu.memory_space<vmem>>, vector<32x128xbf16>
    tpu.vector_store %arg6[%c0_10, %c0_11], %15 {strides = array<i32>} : memref<32x128xbf16, #tpu.memory_space<vmem>>, vector<32x128xbf16>,
    return
  }
  func.func @transform_0(%arg0: i32) -> (i32, i32) {
    %c0_i32 = arith.constant 0 : i32
    %c0_i32_0 = arith.constant 0 : i32
    return %arg0, %c0_i32 : i32, i32
  }
  func.func @transform_1(%arg0: i32) -> (i32, i32) {
    %c0_i32 = arith.constant 0 : i32
    %c0_i32_0 = arith.constant 0 : i32
    %c0_i32_1 = arith.constant 0 : i32
    return %c0_i32, %c0_i32_0 : i32, i32
  }
  func.func @transform_2(%arg0: i32) -> (i32, i32) {
    %c0_i32 = arith.constant 0 : i32
    %c0_i32_0 = arith.constant 0 : i32
    %c0_i32_1 = arith.constant 0 : i32
    return %c0_i32, %c0_i32_0 : i32, i32
  }
  func.func @transform_3(%arg0: i32) -> (i32, i32) {
    %c0_i32 = arith.constant 0 : i32
    %c0_i32_0 = arith.constant 0 : i32
    %c0_i32_1 = arith.constant 0 : i32
    return %c0_i32, %c0_i32_0 : i32, i32
  }
  func.func @transform_4(%arg0: i32) -> (i32, i32) {
    %c0_i32 = arith.constant 0 : i32
    %c0_i32_0 = arith.constant 0 : i32
    %c0_i32_1 = arith.constant 0 : i32
    return %c0_i32, %c0_i32_0 : i32, i32
  }
  func.func @transform_5(%arg0: i32) -> (i32, i32) {
    %c0_i32 = arith.constant 0 : i32
    %c0_i32_0 = arith.constant 0 : i32
    return %arg0, %c0_i32 : i32, i32
  }
}

module attributes {stable_mosaic.version = 11 : i64} {
  func.func @_layer1_stats_kernel(%arg0: i32, %arg1: memref<32x128xbf16, #tpu.memory_space<vmem>>, %arg2: memref<128x128xbf16, #tpu.memory_space<vmem>>, %arg3: memref<1x128xf32, #tpu.memory_space<vmem>>, %arg4: memref<32x128xf32, #tpu.memory_space<vmem>>, %arg5: memref<1x128xf32, #tpu.memory_space<vmem>>, %arg6: memref<1x128xf32, #tpu.memory_space<vmem>>) attributes {dimension_semantics = [#tpu.dimension_semantics<arbitrary>], iteration_bounds = array<i64: 2>, scalar_prefetch = 0 : i64, scratch_operands = 0 : i64, tpu.core_type = #tpu.core_type<tc>, window_params = [{transform_indices = @transform_0, window_bounds = array<i64: 32, 128>}, {pipeline_mode = #tpu.pipeline_mode<synchronous>, transform_indices = @transform_1, window_bounds = array<i64: 128, 128>}, {pipeline_mode = #tpu.pipeline_mode<synchronous>, transform_indices = @transform_2, window_bounds = array<i64: 1, 128>}, {transform_indices = @transform_3, window_bounds = array<i64: 32, 128>}, {pipeline_mode = #tpu.pipeline_mode<synchronous>, transform_indices = @transform_4, window_bounds = array<i64: 1, 128>}, {pipeline_mode = #tpu.pipeline_mode<synchronous>, transform_indices = @transform_5, window_bounds = array<i64: 1, 128>}]} {
    %c0_i32 = arith.constant 0 : i32
    %0 = arith.cmpi eq, %arg0, %c0_i32 : i32
    %1 = arith.extui %0 : i1 to i32
    %c0_i32_0 = arith.constant 0 : i32
    %2 = arith.cmpi ne, %1, %c0_i32_0 : i32
    scf.if %2 {
      %cst_19 = arith.constant 0.000000e+00 : f32
      %31 = vector.broadcast %cst_19 : f32 to vector<1x128xf32>
      %c0_20 = arith.constant 0 : index
      %c0_21 = arith.constant 0 : index
      %32 = vector.load %arg5[%c0_20, %c0_21] : memref<1x128xf32, #tpu.memory_space<vmem>>, vector<1x128xf32>
      tpu.vector_store %arg5[%c0_20, %c0_21], %31 {strides = array<i32>} : memref<1x128xf32, #tpu.memory_space<vmem>>, vector<1x128xf32>,
      %cst_22 = arith.constant 0.000000e+00 : f32
      %33 = vector.broadcast %cst_22 : f32 to vector<1x128xf32>
      %c0_23 = arith.constant 0 : index
      %c0_24 = arith.constant 0 : index
      %34 = vector.load %arg6[%c0_23, %c0_24] : memref<1x128xf32, #tpu.memory_space<vmem>>, vector<1x128xf32>
      tpu.vector_store %arg6[%c0_23, %c0_24], %33 {strides = array<i32>} : memref<1x128xf32, #tpu.memory_space<vmem>>, vector<1x128xf32>,
    } else {
    }
    %c0 = arith.constant 0 : index
    %c0_1 = arith.constant 0 : index
    %3 = vector.load %arg1[%c0, %c0_1] : memref<32x128xbf16, #tpu.memory_space<vmem>>, vector<32x128xbf16>
    %c0_2 = arith.constant 0 : index
    %c0_3 = arith.constant 0 : index
    %4 = vector.load %arg2[%c0_2, %c0_3] : memref<128x128xbf16, #tpu.memory_space<vmem>>, vector<128x128xbf16>
    %cst = arith.constant dense<0.000000e+00> : vector<32x128xf32>
    %5 = tpu.matmul %3, %4, %cst {dimension_numbers = #tpu.dot_dimension_numbers<[1], [0], [0], [1], [0, 0, 1, 1], [], []>} : vector<32x128xbf16>, vector<128x128xbf16>, vector<32x128xf32> -> vector<32x128xf32>
    %c0_4 = arith.constant 0 : index
    %c0_5 = arith.constant 0 : index
    %6 = vector.load %arg3[%c0_4, %c0_5] : memref<1x128xf32, #tpu.memory_space<vmem>>, vector<1x128xf32>
    %7 = vector.broadcast %6 : vector<1x128xf32> to vector<32x128xf32>
    %8 = arith.addf %5, %7 : vector<32x128xf32>
    %c0_6 = arith.constant 0 : index
    %c0_7 = arith.constant 0 : index
    %9 = vector.load %arg4[%c0_6, %c0_7] : memref<32x128xf32, #tpu.memory_space<vmem>>, vector<32x128xf32>
    tpu.vector_store %arg4[%c0_6, %c0_7], %8 {strides = array<i32>} : memref<32x128xf32, #tpu.memory_space<vmem>>, vector<32x128xf32>,
    %10 = tpu.iota {dimensions = array<i32: 0>} : vector<32x1xi32>
    %c32_i32 = arith.constant 32 : i32
    %11 = arith.muli %arg0, %c32_i32 : i32
    %12 = vector.broadcast %11 : i32 to vector<32x1xi32>
    %13 = arith.addi %10, %12 : vector<32x1xi32>
    %c50_i32 = arith.constant 50 : i32
    %14 = vector.broadcast %c50_i32 : i32 to vector<32x1xi32>
    %15 = arith.cmpi slt, %13, %14 : vector<32x1xi32>
    %cst_8 = arith.constant 0.000000e+00 : f32
    %16 = vector.shape_cast %15 : vector<32x1xi1> to vector<32x1xi1>
    %17 = vector.broadcast %16 : vector<32x1xi1> to vector<32x128xi1>
    %18 = vector.broadcast %cst_8 : f32 to vector<32x128xf32>
    %19 = arith.select %17, %8, %18 : vector<32x128xi1>, vector<32x128xf32>
    %c0_9 = arith.constant 0 : index
    %c0_10 = arith.constant 0 : index
    %20 = vector.load %arg5[%c0_9, %c0_10] : memref<1x128xf32, #tpu.memory_space<vmem>>, vector<1x128xf32>
    %cst_11 = arith.constant dense<0.000000e+00> : vector<128xf32>
    %21 = vector.multi_reduction <add>, %19, %cst_11 [0] : vector<32x128xf32> to vector<128xf32>
    %22 = vector.shape_cast %21 : vector<128xf32> to vector<1x128xf32>
    %23 = arith.addf %20, %22 : vector<1x128xf32>
    %c0_12 = arith.constant 0 : index
    %c0_13 = arith.constant 0 : index
    %24 = vector.load %arg5[%c0_12, %c0_13] : memref<1x128xf32, #tpu.memory_space<vmem>>, vector<1x128xf32>
    tpu.vector_store %arg5[%c0_12, %c0_13], %23 {strides = array<i32>} : memref<1x128xf32, #tpu.memory_space<vmem>>, vector<1x128xf32>,
    %c0_14 = arith.constant 0 : index
    %c0_15 = arith.constant 0 : index
    %25 = vector.load %arg6[%c0_14, %c0_15] : memref<1x128xf32, #tpu.memory_space<vmem>>, vector<1x128xf32>
    %26 = arith.mulf %19, %19 : vector<32x128xf32>
    %cst_16 = arith.constant dense<0.000000e+00> : vector<128xf32>
    %27 = vector.multi_reduction <add>, %26, %cst_16 [0] : vector<32x128xf32> to vector<128xf32>
    %28 = vector.shape_cast %27 : vector<128xf32> to vector<1x128xf32>
    %29 = arith.addf %25, %28 : vector<1x128xf32>
    %c0_17 = arith.constant 0 : index
    %c0_18 = arith.constant 0 : index
    %30 = vector.load %arg6[%c0_17, %c0_18] : memref<1x128xf32, #tpu.memory_space<vmem>>, vector<1x128xf32>
    tpu.vector_store %arg6[%c0_17, %c0_18], %29 {strides = array<i32>} : memref<1x128xf32, #tpu.memory_space<vmem>>, vector<1x128xf32>,
    return
  }
  func.func @transform_0(%arg0: i32) -> (i32, i32) {
    %c0_i32 = arith.constant 0 : i32
    %c0_i32_0 = arith.constant 0 : i32
    return %arg0, %c0_i32 : i32, i32
  }
  func.func @transform_1(%arg0: i32) -> (i32, i32) {
    %c0_i32 = arith.constant 0 : i32
    %c0_i32_0 = arith.constant 0 : i32
    %c0_i32_1 = arith.constant 0 : i32
    return %c0_i32, %c0_i32_0 : i32, i32
  }
  func.func @transform_2(%arg0: i32) -> (i32, i32) {
    %c0_i32 = arith.constant 0 : i32
    %c0_i32_0 = arith.constant 0 : i32
    %c0_i32_1 = arith.constant 0 : i32
    return %c0_i32, %c0_i32_0 : i32, i32
  }
  func.func @transform_3(%arg0: i32) -> (i32, i32) {
    %c0_i32 = arith.constant 0 : i32
    %c0_i32_0 = arith.constant 0 : i32
    return %arg0, %c0_i32 : i32, i32
  }
  func.func @transform_4(%arg0: i32) -> (i32, i32) {
    %c0_i32 = arith.constant 0 : i32
    %c0_i32_0 = arith.constant 0 : i32
    %c0_i32_1 = arith.constant 0 : i32
    return %c0_i32, %c0_i32_0 : i32, i32
  }
  func.func @transform_5(%arg0: i32) -> (i32, i32) {
    %c0_i32 = arith.constant 0 : i32
    %c0_i32_0 = arith.constant 0 : i32
    %c0_i32_1 = arith.constant 0 : i32
    return %c0_i32, %c0_i32_0 : i32, i32
  }
}

</mosaic_0001>

<llo_original>
// kernel: prediction_mlp.3
$region0: #{prediction_mlp.3}
  #allocation0 [shape = 'u32[]', space=smem, size = 0x4, offset = 0x4, fixed_abs, tag = 'smem constant byte address 0x4 - core index']
  #allocation1 [shape = 'u32[144,128]{1,0:T(1,128)}', space=vmem, size = 0x12000, scoped, tag = 'internal scratch']
  %s0 = inlined_call_operand.vmem [shape: f32[64,128], index: 0, kind: input, shape index: {}]
  %s1 = inlined_call_operand.vmem [shape: f32[1,128], index: 1, kind: input, shape index: {}]
  %s2 = inlined_call_operand.vmem [shape: f32[1,128], index: 2, kind: input, shape index: {}]
  %s3 = inlined_call_operand.vmem [shape: bf16[128,128], index: 3, kind: input, shape index: {}]
  %s4 = inlined_call_operand.vmem [shape: f32[1,128], index: 4, kind: input, shape index: {}]
  %s5 = inlined_call_operand.vmem [shape: bf16[64,128], index: 5, kind: output, shape index: {}]
  %s6 = sld [smem:[#allocation0]]
  $region53: #{prediction_mlp.3} parent=0
    _
  %s8 = ssub.s32 1, %s6
  %s9 = scalar_select 0, %s8, %s6
  loop: start=0, step=1, limit=4
  $region2: #{prediction_mlp.3} parent=0 // loop_pre_header
    _
  $region3: #{prediction_mlp.3} parent=0 // loop_header
    %s11 = sphi 0, %s15
    %p12 = scmp.ge.s32.totalorder %s11, 4
    %s21 = sphi 0, %s23
    %s24 = sphi 0, %s21
    %s25 = sphi 0, %s24
    %s41 = sphi 0, %s25
    %s45 = sphi 0, %s45
    %s47 = sphi 0, %s45
    %s48 = sphi 0, %s47
    %s62 = sphi 0, %s48
    %s66 = sphi 0, %s66
    %s68 = sphi 0, %s66
    %s69 = sphi 0, %s68
    %s83 = sphi 0, %s69
    %s87 = sphi 0, %s87
    %s89 = sphi 0, %s87
    %s90 = sphi 0, %s89
    %s104 = sphi 0, %s90
    %s108 = sphi 0, %s108
    %s110 = sphi 0, %s108
    %s111 = sphi 0, %s110
    %s125 = sphi 0, %s111
    %s131 = sphi 0, %s133
    %s134 = sphi 0, %s131
    %s135 = sphi 0, %s134
    %s151 = sphi 0, %s135
  $region4: #{prediction_mlp.3} parent=0 // loop_header_branch
    %14 = sbr.rel (%p12) target = $region8
  $region5: #{prediction_mlp.3} parent=0 // loop_body
    %s16 = ssub.s32 %s11, 1
    %s17 = ssub.s32 %s11, 2
    %s18 = sadd.s32 %s11, 1
    %s19 = ssub.s32 %s11, %s18
    %p20 = scmp.eq.s32.totalorder %s19, 0
    %s22 = sadd.s32 %s21, 1
    %s23 = scalar_select %p20, %s21, %s22
    %p26 = pneg %p20
    %p27 = scmp.eq.s32.totalorder %s11, 1
    %p28 = por %p26, %p27
    %p29 = scmp.ne.s32.totalorder %s21, %s24
    %p30 = scmp.eq.s32.totalorder %s11, 0
    %p31 = por %p29, %p30
    %p32 = scmp.ne.s32.totalorder %s21, %s24
    %p33 = scmp.eq.s32.totalorder %s16, 1
    %p34 = por %p32, %p33
    %p35 = scmp.ne.s32.totalorder %s24, %s25
    %p36 = scmp.eq.s32.totalorder %s16, 0
    %p37 = por %p35, %p36
    %p38 = scmp.ne.s32.totalorder %s24, %s25
    %p39 = scmp.eq.s32.totalorder %s17, 1
    %p40 = por %p38, %p39
    %p42 = scmp.ne.s32.totalorder %s25, %s41
    %p43 = scmp.eq.s32.totalorder %s17, 0
    %p44 = por %p42, %p43
    %s46 = sadd.s32 %s45, 1
    %p49 = scmp.eq.s32.totalorder %s11, 1
    %p50 = scmp.ne.s32.totalorder %s45, %s47
    %p51 = scmp.eq.s32.totalorder %s11, 0
    %p52 = por %p50, %p51
    %p53 = scmp.ne.s32.totalorder %s45, %s47
    %p54 = scmp.eq.s32.totalorder %s16, 1
    %p55 = por %p53, %p54
    %p56 = scmp.ne.s32.totalorder %s47, %s48
    %p57 = scmp.eq.s32.totalorder %s16, 0
    %p58 = por %p56, %p57
    %p59 = scmp.ne.s32.totalorder %s47, %s48
    %p60 = scmp.eq.s32.totalorder %s17, 1
    %p61 = por %p59, %p60
    %p63 = scmp.ne.s32.totalorder %s48, %s62
    %p64 = scmp.eq.s32.totalorder %s17, 0
    %p65 = por %p63, %p64
    %s67 = sadd.s32 %s66, 1
    %p70 = scmp.eq.s32.totalorder %s11, 1
    %p71 = scmp.ne.s32.totalorder %s66, %s68
    %p72 = scmp.eq.s32.totalorder %s11, 0
    %p73 = por %p71, %p72
    %p74 = scmp.ne.s32.totalorder %s66, %s68
    %p75 = scmp.eq.s32.totalorder %s16, 1
    %p76 = por %p74, %p75
    %p77 = scmp.ne.s32.totalorder %s68, %s69
    %p78 = scmp.eq.s32.totalorder %s16, 0
    %p79 = por %p77, %p78
    %p80 = scmp.ne.s32.totalorder %s68, %s69
    %p81 = scmp.eq.s32.totalorder %s17, 1
    %p82 = por %p80, %p81
    %p84 = scmp.ne.s32.totalorder %s69, %s83
    %p85 = scmp.eq.s32.totalorder %s17, 0
    %p86 = por %p84, %p85
    %s88 = sadd.s32 %s87, 1
    %p91 = scmp.eq.s32.totalorder %s11, 1
    %p92 = scmp.ne.s32.totalorder %s87, %s89
    %p93 = scmp.eq.s32.totalorder %s11, 0
    %p94 = por %p92, %p93
    %p95 = scmp.ne.s32.totalorder %s87, %s89
    %p96 = scmp.eq.s32.totalorder %s16, 1
    %p97 = por %p95, %p96
    %p98 = scmp.ne.s32.totalorder %s89, %s90
    %p99 = scmp.eq.s32.totalorder %s16, 0
    %p100 = por %p98, %p99
    %p101 = scmp.ne.s32.totalorder %s89, %s90
    %p102 = scmp.eq.s32.totalorder %s17, 1
    %p103 = por %p101, %p102
    %p105 = scmp.ne.s32.totalorder %s90, %s104
    %p106 = scmp.eq.s32.totalorder %s17, 0
    %p107 = por %p105, %p106
    %s109 = sadd.s32 %s108, 1
    %p112 = scmp.eq.s32.totalorder %s11, 1
    %p113 = scmp.ne.s32.totalorder %s108, %s110
    %p114 = scmp.eq.s32.totalorder %s11, 0
    %p115 = por %p113, %p114
    %p116 = scmp.ne.s32.totalorder %s108, %s110
    %p117 = scmp.eq.s32.totalorder %s16, 1
    %p118 = por %p116, %p117
    %p119 = scmp.ne.s32.totalorder %s110, %s111
    %p120 = scmp.eq.s32.totalorder %s16, 0
    %p121 = por %p119, %p120
    %p122 = scmp.ne.s32.totalorder %s110, %s111
    %p123 = scmp.eq.s32.totalorder %s17, 1
    %p124 = por %p122, %p123
    %p126 = scmp.ne.s32.totalorder %s111, %s125
    %p127 = scmp.eq.s32.totalorder %s17, 0
    %p128 = por %p126, %p127
    %s129 = ssub.s32 %s11, %s18
    %p130 = scmp.eq.s32.totalorder %s129, 0
    %s132 = sadd.s32 %s131, 1
    %s133 = scalar_select %p130, %s131, %s132
    %p136 = pneg %p130
    %p137 = scmp.eq.s32.totalorder %s11, 1
    %p138 = por %p136, %p137
    %p139 = scmp.ne.s32.totalorder %s131, %s134
    %p140 = scmp.eq.s32.totalorder %s11, 0
    %p141 = por %p139, %p140
    %p142 = scmp.ne.s32.totalorder %s131, %s134
    %p143 = scmp.eq.s32.totalorder %s16, 1
    %p144 = por %p142, %p143
    %p145 = scmp.ne.s32.totalorder %s134, %s135
    %p146 = scmp.eq.s32.totalorder %s16, 0
    %p147 = por %p145, %p146
    %p148 = scmp.ne.s32.totalorder %s134, %s135
    %p149 = scmp.eq.s32.totalorder %s17, 1
    %p150 = por %p148, %p149
    %p152 = scmp.ne.s32.totalorder %s135, %s151
    %p153 = scmp.eq.s32.totalorder %s17, 0
    %p154 = por %p152, %p153
    %p155 = scmp.le.s32.totalorder 1, %s11
    %p156 = scmp.lt.s32.totalorder %s11, 3
    %p157 = pnand %p155, %p156
    %p158 = pneg %p157
    // Predicated region
    $region9: #{prediction_mlp.3} parent=5 // pred_check
      _
    $region10: #{prediction_mlp.3} parent=5 // pred_check_branch
      %160 = sbr.rel (%p157) target = $region12
    $region11: #{prediction_mlp.3} parent=5 // pred_region
      %s161 = ssub.s32 %s11, 1
      // Predicated region
      $region13: #{prediction_mlp.3} parent=11 // pred_check
        %p162 = pneg %p58
      $region14: #{prediction_mlp.3} parent=11 // pred_check_branch
        %164 = sbr.rel (%p162) target = $region16
      $region15: #{prediction_mlp.3} parent=11 // pred_region
        _
      $region16: #{prediction_mlp.3} parent=11 // pred_fallthru
        _
      // Predicated region
      $region17: #{prediction_mlp.3} parent=11 // pred_check
        %p165 = pneg %p79
      $region18: #{prediction_mlp.3} parent=11 // pred_check_branch
        %167 = sbr.rel (%p165) target = $region20
      $region19: #{prediction_mlp.3} parent=11 // pred_region
        _
      $region20: #{prediction_mlp.3} parent=11 // pred_fallthru
        _
      // Predicated region
      $region21: #{prediction_mlp.3} parent=11 // pred_check
        %p168 = pneg %p100
      $region22: #{prediction_mlp.3} parent=11 // pred_check_branch
        %170 = sbr.rel (%p168) target = $region24
      $region23: #{prediction_mlp.3} parent=11 // pred_region
        _
      $region24: #{prediction_mlp.3} parent=11 // pred_fallthru
        _
      // Predicated region
      $region25: #{prediction_mlp.3} parent=11 // pred_check
        %p171 = pneg %p121
      $region26: #{prediction_mlp.3} parent=11 // pred_check_branch
        %173 = sbr.rel (%p171) target = $region28
      $region27: #{prediction_mlp.3} parent=11 // pred_region
        _
      $region28: #{prediction_mlp.3} parent=11 // pred_fallthru
        _
    $region12: #{prediction_mlp.3} parent=5 // pred_fallthru
      _
    %p174 = scmp.lt.s32.totalorder %s11, 2
    // Predicated region
    $region29: #{prediction_mlp.3} parent=5 // pred_check
      %p175 = pneg %p174
    $region30: #{prediction_mlp.3} parent=5 // pred_check_branch
      %177 = sbr.rel (%p175) target = $region32
    $region31: #{prediction_mlp.3} parent=5 // pred_region
      // Predicated region
      $region33: #{prediction_mlp.3} parent=31 // pred_check
        %p178 = pneg %p31
      $region34: #{prediction_mlp.3} parent=31 // pred_check_branch
        %180 = sbr.rel (%p178) target = $region36
      $region35: #{prediction_mlp.3} parent=31 // pred_region
        %s181 = smul.u32 4, %s11
        %p182 = scmp.lt.s32.totalorder %s181, 7
        %s183 = scalar_select %p182, %s181, 7
        %s184 = smul.addr %s183, 8
        %s185 = scalar_lea.vmem %s0, %s184
        %s186 = smul.u32 4, %s11
      $region36: #{prediction_mlp.3} parent=31 // pred_fallthru
        _
    $region32: #{prediction_mlp.3} parent=5 // pred_fallthru
      _
    %p187 = scmp.le.s32.totalorder 1, %s11
    %p188 = scmp.lt.s32.totalorder %s11, 3
    %p189 = pnand %p187, %p188
    %p190 = pneg %p189
    // Predicated region
    $region37: #{prediction_mlp.3} parent=5 // pred_check
      _
    $region38: #{prediction_mlp.3} parent=5 // pred_check_branch
      %192 = sbr.rel (%p189) target = $region40
    $region39: #{prediction_mlp.3} parent=5 // pred_region
      %s193 = ssub.s32 %s11, 1
      %s194 = smul.u32 4, %s16
      %p195 = scmp.lt.s32.totalorder %s194, 7
      %s196 = scalar_select %p195, %s194, 7
      %s197 = smul.addr %s196, 8
      %s198 = scalar_lea.vmem %s0, %s197
      %p199 = pneg %p37
      %p200 = pneg %p34
      %p201 = pneg %p58
      %p202 = pneg %p55
      %p203 = pneg %p79
      %p204 = pneg %p76
      %p205 = pneg %p100
      %p206 = pneg %p97
      %p207 = pneg %p121
      %p208 = pneg %p118
      %p209 = pneg %p147
      %p210 = pneg %p144
      %s211 = smul.u32 4, %s16
      %p212 = scmp.lt.s32.totalorder %s211, 7
      %s213 = scalar_select %p212, %s211, 7
      %s214 = smul.addr %s213, 4
      %s215 = scalar_lea.vmem %s5, %s214
      %s216 = smul.u32 4, %s16
      %p217 = scmp.lt.s32.totalorder %s216, 7
      %s218 = scalar_select %p217, %s216, 7
      %s219 = smul.addr %s218, 8
      %s220 = scalar_lea.vmem %s0, %s219
      %s221 = smul.u32 4, %s16
      %s222 = smul.u32 4, %s16
      %p223 = scmp.lt.s32.totalorder %s222, 7
      %s224 = scalar_select %p223, %s222, 7
      %s225 = smul.addr %s224, 4
      %s226 = scalar_lea.vmem %s5, %s225
      %s227 = smul.u32 4, %s16
      %v229 = vld [vmem:[%s220] sm:$0xff]
      %v230 = vld [vmem:[%s220 + $0x8] sm:$0xff]
      %v231 = vld [vmem:[%s220 + $0x10] sm:$0xff]
      %v232 = vld [vmem:[%s220 + $0x18] sm:$0xff]
      %v233 = vld [vmem:[%s1] sm:$0x1]
      %v235 = vlaneseq
      %v236 = vshrl.u32 %v235, 7
      %v237 = vsub.s32 0, %v236
      %v238 = vrot.slane %v233, %v237
      %v240 = vmul.f32 %v229, %v238
      %v241 = vmul.f32 %v230, %v238
      %v242 = vmul.f32 %v231, %v238
      %v243 = vmul.f32 %v232, %v238
      %v244 = vld [vmem:[%s2] sm:$0x1]
      %v246 = vlaneseq
      %v247 = vshrl.u32 %v246, 7
      %v248 = vsub.s32 0, %v247
      %v249 = vrot.slane %v244, %v248
      %v251 = vadd.f32 %v240, %v249
      %v252 = vadd.f32 %v241, %v249
      %v253 = vadd.f32 %v242, %v249
      %v254 = vadd.f32 %v243, %v249
      %v255 = vmax.f32 %v251, 0.0
      %v256 = vmax.f32 %v252, 0.0
      %v257 = vmax.f32 %v253, 0.0
      %v258 = vmax.f32 %v254, 0.0
      %v259 = vpack.c.bf16 %v256, %v255
      %v260 = vpack.c.bf16 %v258, %v257
      %v261 = vld [vmem:[%s3] sm:$0xf]
      %v262 = vld [vmem:[%s3 + $0x4] sm:$0xf]
      %v263 = vld [vmem:[%s3 + $0x8] sm:$0xf]
      %v264 = vld [vmem:[%s3 + $0xc] sm:$0xf]
      %v265 = vld [vmem:[%s3 + $0x10] sm:$0xf]
      %v266 = vld [vmem:[%s3 + $0x14] sm:$0xf]
      %v267 = vld [vmem:[%s3 + $0x18] sm:$0xf]
      %v268 = vld [vmem:[%s3 + $0x1c] sm:$0xf]
      %v269 = vld [vmem:[%s3 + $0x20] sm:$0xf]
      %v270 = vld [vmem:[%s3 + $0x24] sm:$0xf]
      %v271 = vld [vmem:[%s3 + $0x28] sm:$0xf]
      %v272 = vld [vmem:[%s3 + $0x2c] sm:$0xf]
      %v273 = vld [vmem:[%s3 + $0x30] sm:$0xf]
      %v274 = vld [vmem:[%s3 + $0x34] sm:$0xf]
      %v275 = vld [vmem:[%s3 + $0x38] sm:$0xf]
      %v276 = vld [vmem:[%s3 + $0x3c] sm:$0xf]
      %v277 = vld [vmem:[%s4] sm:$0x1]
      %v279 = vlaneseq
      %v280 = vshrl.u32 %v279, 7
      %v281 = vsub.s32 0, %v280
      %v282 = vrot.slane %v277, %v281
      %v300 = vunpack.c.l.b16 %v261
      %v301 = vunpack.c.l.b16 %v262
      %v302 = vunpack.c.l.b16 %v263
      %v303 = vunpack.c.l.b16 %v264
      %v304 = vunpack.c.l.b16 %v265
      %v305 = vunpack.c.l.b16 %v266
      %v306 = vunpack.c.l.b16 %v267
      %v307 = vunpack.c.l.b16 %v268
      %v308 = vunpack.c.l.b16 %v269
      %v309 = vunpack.c.l.b16 %v270
      %v310 = vunpack.c.l.b16 %v271
      %v311 = vunpack.c.l.b16 %v272
      %v312 = vunpack.c.l.b16 %v273
      %v313 = vunpack.c.l.b16 %v274
      %v314 = vunpack.c.l.b16 %v275
      %v315 = vunpack.c.l.b16 %v276
      %v316 = vpack.c.b16 %v301, %v300
      %v317 = vpack.c.b16 %v303, %v302
      %v318 = vpack.c.b16 %v305, %v304
      %v319 = vpack.c.b16 %v307, %v306
      %v320 = vpack.c.b16 %v309, %v308
      %v321 = vpack.c.b16 %v311, %v310
      %v322 = vpack.c.b16 %v313, %v312
      %v323 = vpack.c.b16 %v315, %v314
      %332 = vmatprep.subr.bf16.mxu0 0
      %333 = vmatpush1.bf16.msra.mxu0 %v323
      %334 = vmatprep.subr.bf16.mxu0 0
      %335 = vmatpush1.bf16.msra.mxu0 %v322
      %336 = vmatprep.subr.bf16.mxu0 0
      %337 = vmatpush1.bf16.msra.mxu0 %v321
      %338 = vmatprep.subr.bf16.mxu0 0
      %339 = vmatpush1.bf16.msra.mxu0 %v320
      %340 = vmatprep.subr.bf16.mxu0 0
      %341 = vmatpush1.bf16.msra.mxu0 %v319
      %342 = vmatprep.subr.bf16.mxu0 0
      %343 = vmatpush1.bf16.msra.mxu0 %v318
      %344 = vmatprep.subr.bf16.mxu0 0
      %345 = vmatpush1.bf16.msra.mxu0 %v317
      %346 = vmatprep.subr.bf16.mxu0 0
      %347 = vmatpush1.bf16.msra.mxu0 %v316
      %348 = vmatprep.subr.bf16.mxu0 0
      %349 = vmatpush2.bf16.msra.mxu0 0
      %350 = vmatprep.subr.bf16.mxu0 0
      %351 = vmatpush2.bf16.msra.mxu0 0
      %352 = vmatprep.subr.bf16.mxu0 0
      %353 = vmatpush2.bf16.msra.mxu0 0
      %354 = vmatprep.subr.bf16.mxu0 0
      %355 = vmatpush2.bf16.msra.mxu0 0
      %356 = vmatprep.subr.bf16.mxu0 0
      %357 = vmatpush2.bf16.msra.mxu0 0
      %358 = vmatprep.subr.bf16.mxu0 0
      %359 = vmatpush2.bf16.msra.mxu0 0
      %360 = vmatprep.subr.bf16.mxu0 0
      %361 = vmatpush2.bf16.msra.mxu0 0
      %362 = vmatprep.subr.bf16.mxu0 0
      %363 = vmatpush2.bf16.msra.mxu0 0
      %364 = vmatprep.mubr.bf16.mxu0 0
      %365 = vmatmul.mubr.bf16.gmra.mxu0 %v259
      %v366 = vpop.f32.mrf.mxu0
      %v367 = vadd.f32 %v282, %v366
      %v368 = vpop.f32.mrf.mxu0
      %v369 = vpop.f32.mrf.mxu0
      %v370 = vadd.f32 %v282, %v369
      %v371 = vpop.f32.mrf.mxu0
      %372 = vmatprep.mubr.bf16.mxu0 0
      %373 = vmatmul.mubr.bf16.gmra.mxu0 %v260
      %v374 = vpop.f32.mrf.mxu0
      %v375 = vadd.f32 %v282, %v374
      %v376 = vpop.f32.mrf.mxu0
      %v377 = vpop.f32.mrf.mxu0
      %v378 = vadd.f32 %v282, %v377
      %v379 = vpop.f32.mrf.mxu0
      %380 = vdwg.mxu0
      %v381 = vpack.c.bf16 %v370, %v367
      %v382 = vpack.c.bf16 %v378, %v375
      %v385 = vunpack.c.l.b16 %v381
      %v386 = vunpack.c.h.b16 %v381
      %v387 = vunpack.c.l.b16 %v382
      %v388 = vunpack.c.h.b16 %v382
      %v389 = vpack.c.b16 %v385, %v385
      %v390 = vpack.c.b16 %v386, %v386
      %v391 = vpack.c.b16 %v387, %v387
      %v392 = vpack.c.b16 %v388, %v388
      %397 = vst [vmem:[%s226] sm:$0xf] %v389
      %398 = vst [vmem:[%s226 + $0x4] sm:$0xf] %v390
      %399 = vst [vmem:[%s226 + $0x8] sm:$0xf] %v391
      %400 = vst [vmem:[%s226 + $0xc] sm:$0xf] %v392
      %s401 = smul.u32 4, %s16
      %p402 = scmp.lt.s32.totalorder %s401, 7
      %s403 = scalar_select %p402, %s401, 7
      %s404 = smul.addr %s403, 4
      %s405 = scalar_lea.vmem %s5, %s404
      // Predicated region
      $region41: #{prediction_mlp.3} parent=39 // pred_check
        %p406 = pneg %p144
      $region42: #{prediction_mlp.3} parent=39 // pred_check_branch
        %408 = sbr.rel (%p406) target = $region44
      $region43: #{prediction_mlp.3} parent=39 // pred_region
        %s409 = smul.u32 4, %s16
      $region44: #{prediction_mlp.3} parent=39 // pred_fallthru
        _
    $region40: #{prediction_mlp.3} parent=5 // pred_fallthru
      _
    %p410 = scmp.le.s32.totalorder 2, %s11
    // Predicated region
    $region45: #{prediction_mlp.3} parent=5 // pred_check
      %p411 = pneg %p410
    $region46: #{prediction_mlp.3} parent=5 // pred_check_branch
      %413 = sbr.rel (%p411) target = $region48
    $region47: #{prediction_mlp.3} parent=5 // pred_region
      %s414 = ssub.s32 %s11, 2
      // Predicated region
      $region49: #{prediction_mlp.3} parent=47 // pred_check
        %p415 = pneg %p150
      $region50: #{prediction_mlp.3} parent=47 // pred_check_branch
        %417 = sbr.rel (%p415) target = $region52
      $region51: #{prediction_mlp.3} parent=47 // pred_region
        %s418 = smul.u32 4, %s17
        %p419 = scmp.lt.s32.totalorder %s418, 7
        %s420 = scalar_select %p419, %s418, 7
        %s421 = smul.addr %s420, 4
        %s422 = scalar_lea.vmem %s5, %s421
      $region52: #{prediction_mlp.3} parent=47 // pred_fallthru
        _
    $region48: #{prediction_mlp.3} parent=5 // pred_fallthru
      _
  $region6: #{prediction_mlp.3} parent=0 // loop_footer
    %s15 = sadd.s32 1, %s11
  $region7: #{prediction_mlp.3} parent=0 // loop_footer_branch
    %10 = sbr.rel target = $region3
  $region8: #{prediction_mlp.3} parent=0 // loop_exit
    _

// kernel: prediction_mlp.2
$region0: #{prediction_mlp.2}
  #allocation0 [shape = 'u32[]', space=smem, size = 0x4, offset = 0x4, fixed_abs, tag = 'smem constant byte address 0x4 - core index']
  #allocation1 [shape = 'u32[144,128]{1,0:T(1,128)}', space=vmem, size = 0x12000, scoped, tag = 'internal scratch']
  %s0 = inlined_call_operand.vmem [shape: bf16[64,128], index: 0, kind: input, shape index: {}]
  %s1 = inlined_call_operand.vmem [shape: bf16[128,128], index: 1, kind: input, shape index: {}]
  %s2 = inlined_call_operand.vmem [shape: f32[1,128], index: 2, kind: input, shape index: {}]
  %s3 = inlined_call_operand.vmem [shape: f32[64,128], index: 3, kind: output, shape index: {0}]
  %s4 = inlined_call_operand.vmem [shape: f32[1,128], index: 4, kind: output, shape index: {1}]
  %s5 = inlined_call_operand.vmem [shape: f32[1,128], index: 5, kind: output, shape index: {2}]
  %6 = xla_tuple %s3, %s4, %s5
  %s7 = sld [smem:[#allocation0]]
  $region65: #{prediction_mlp.2} parent=0
    _
  %s9 = ssub.s32 1, %s7
  %s10 = scalar_select 0, %s9, %s7
  loop: start=0, step=1, limit=4
  $region2: #{prediction_mlp.2} parent=0 // loop_pre_header
    _
  $region3: #{prediction_mlp.2} parent=0 // loop_header
    %s12 = sphi 0, %s16
    %p13 = scmp.ge.s32.totalorder %s12, 4
    %s22 = sphi 0, %s24
    %s25 = sphi 0, %s22
    %s26 = sphi 0, %s25
    %s42 = sphi 0, %s26
    %s46 = sphi 0, %s46
    %s48 = sphi 0, %s46
    %s49 = sphi 0, %s48
    %s63 = sphi 0, %s49
    %s67 = sphi 0, %s67
    %s69 = sphi 0, %s67
    %s70 = sphi 0, %s69
    %s84 = sphi 0, %s70
    %s90 = sphi 0, %s92
    %s93 = sphi 0, %s90
    %s94 = sphi 0, %s93
    %s110 = sphi 0, %s94
    %s114 = sphi 0, %s114
    %s116 = sphi 0, %s114
    %s117 = sphi 0, %s116
    %s131 = sphi 0, %s117
    %s135 = sphi 0, %s135
    %s137 = sphi 0, %s135
    %s138 = sphi 0, %s137
    %s152 = sphi 0, %s138
  $region4: #{prediction_mlp.2} parent=0 // loop_header_branch
    %15 = sbr.rel (%p13) target = $region8
  $region5: #{prediction_mlp.2} parent=0 // loop_body
    %s17 = ssub.s32 %s12, 1
    %s18 = ssub.s32 %s12, 2
    %s19 = sadd.s32 %s12, 1
    %s20 = ssub.s32 %s12, %s19
    %p21 = scmp.eq.s32.totalorder %s20, 0
    %s23 = sadd.s32 %s22, 1
    %s24 = scalar_select %p21, %s22, %s23
    %p27 = pneg %p21
    %p28 = scmp.eq.s32.totalorder %s12, 1
    %p29 = por %p27, %p28
    %p30 = scmp.ne.s32.totalorder %s22, %s25
    %p31 = scmp.eq.s32.totalorder %s12, 0
    %p32 = por %p30, %p31
    %p33 = scmp.ne.s32.totalorder %s22, %s25
    %p34 = scmp.eq.s32.totalorder %s17, 1
    %p35 = por %p33, %p34
    %p36 = scmp.ne.s32.totalorder %s25, %s26
    %p37 = scmp.eq.s32.totalorder %s17, 0
    %p38 = por %p36, %p37
    %p39 = scmp.ne.s32.totalorder %s25, %s26
    %p40 = scmp.eq.s32.totalorder %s18, 1
    %p41 = por %p39, %p40
    %p43 = scmp.ne.s32.totalorder %s26, %s42
    %p44 = scmp.eq.s32.totalorder %s18, 0
    %p45 = por %p43, %p44
    %s47 = sadd.s32 %s46, 1
    %p50 = scmp.eq.s32.totalorder %s12, 1
    %p51 = scmp.ne.s32.totalorder %s46, %s48
    %p52 = scmp.eq.s32.totalorder %s12, 0
    %p53 = por %p51, %p52
    %p54 = scmp.ne.s32.totalorder %s46, %s48
    %p55 = scmp.eq.s32.totalorder %s17, 1
    %p56 = por %p54, %p55
    %p57 = scmp.ne.s32.totalorder %s48, %s49
    %p58 = scmp.eq.s32.totalorder %s17, 0
    %p59 = por %p57, %p58
    %p60 = scmp.ne.s32.totalorder %s48, %s49
    %p61 = scmp.eq.s32.totalorder %s18, 1
    %p62 = por %p60, %p61
    %p64 = scmp.ne.s32.totalorder %s49, %s63
    %p65 = scmp.eq.s32.totalorder %s18, 0
    %p66 = por %p64, %p65
    %s68 = sadd.s32 %s67, 1
    %p71 = scmp.eq.s32.totalorder %s12, 1
    %p72 = scmp.ne.s32.totalorder %s67, %s69
    %p73 = scmp.eq.s32.totalorder %s12, 0
    %p74 = por %p72, %p73
    %p75 = scmp.ne.s32.totalorder %s67, %s69
    %p76 = scmp.eq.s32.totalorder %s17, 1
    %p77 = por %p75, %p76
    %p78 = scmp.ne.s32.totalorder %s69, %s70
    %p79 = scmp.eq.s32.totalorder %s17, 0
    %p80 = por %p78, %p79
    %p81 = scmp.ne.s32.totalorder %s69, %s70
    %p82 = scmp.eq.s32.totalorder %s18, 1
    %p83 = por %p81, %p82
    %p85 = scmp.ne.s32.totalorder %s70, %s84
    %p86 = scmp.eq.s32.totalorder %s18, 0
    %p87 = por %p85, %p86
    %s88 = ssub.s32 %s12, %s19
    %p89 = scmp.eq.s32.totalorder %s88, 0
    %s91 = sadd.s32 %s90, 1
    %s92 = scalar_select %p89, %s90, %s91
    %p95 = pneg %p89
    %p96 = scmp.eq.s32.totalorder %s12, 1
    %p97 = por %p95, %p96
    %p98 = scmp.ne.s32.totalorder %s90, %s93
    %p99 = scmp.eq.s32.totalorder %s12, 0
    %p100 = por %p98, %p99
    %p101 = scmp.ne.s32.totalorder %s90, %s93
    %p102 = scmp.eq.s32.totalorder %s17, 1
    %p103 = por %p101, %p102
    %p104 = scmp.ne.s32.totalorder %s93, %s94
    %p105 = scmp.eq.s32.totalorder %s17, 0
    %p106 = por %p104, %p105
    %p107 = scmp.ne.s32.totalorder %s93, %s94
    %p108 = scmp.eq.s32.totalorder %s18, 1
    %p109 = por %p107, %p108
    %p111 = scmp.ne.s32.totalorder %s94, %s110
    %p112 = scmp.eq.s32.totalorder %s18, 0
    %p113 = por %p111, %p112
    %s115 = sadd.s32 %s114, 1
    %p118 = scmp.eq.s32.totalorder %s12, 1
    %p119 = scmp.ne.s32.totalorder %s114, %s116
    %p120 = scmp.eq.s32.totalorder %s12, 0
    %p121 = por %p119, %p120
    %p122 = scmp.ne.s32.totalorder %s114, %s116
    %p123 = scmp.eq.s32.totalorder %s17, 1
    %p124 = por %p122, %p123
    %p125 = scmp.ne.s32.totalorder %s116, %s117
    %p126 = scmp.eq.s32.totalorder %s17, 0
    %p127 = por %p125, %p126
    %p128 = scmp.ne.s32.totalorder %s116, %s117
    %p129 = scmp.eq.s32.totalorder %s18, 1
    %p130 = por %p128, %p129
    %p132 = scmp.ne.s32.totalorder %s117, %s131
    %p133 = scmp.eq.s32.totalorder %s18, 0
    %p134 = por %p132, %p133
    %s136 = sadd.s32 %s135, 1
    %p139 = scmp.eq.s32.totalorder %s12, 1
    %p140 = scmp.ne.s32.totalorder %s135, %s137
    %p141 = scmp.eq.s32.totalorder %s12, 0
    %p142 = por %p140, %p141
    %p143 = scmp.ne.s32.totalorder %s135, %s137
    %p144 = scmp.eq.s32.totalorder %s17, 1
    %p145 = por %p143, %p144
    %p146 = scmp.ne.s32.totalorder %s137, %s138
    %p147 = scmp.eq.s32.totalorder %s17, 0
    %p148 = por %p146, %p147
    %p149 = scmp.ne.s32.totalorder %s137, %s138
    %p150 = scmp.eq.s32.totalorder %s18, 1
    %p151 = por %p149, %p150
    %p153 = scmp.ne.s32.totalorder %s138, %s152
    %p154 = scmp.eq.s32.totalorder %s18, 0
    %p155 = por %p153, %p154
    %p156 = scmp.le.s32.totalorder 1, %s12
    %p157 = scmp.lt.s32.totalorder %s12, 3
    %p158 = pnand %p156, %p157
    %p159 = pneg %p158
    // Predicated region
    $region9: #{prediction_mlp.2} parent=5 // pred_check
      _
    $region10: #{prediction_mlp.2} parent=5 // pred_check_branch
      %161 = sbr.rel (%p158) target = $region12
    $region11: #{prediction_mlp.2} parent=5 // pred_region
      %s162 = ssub.s32 %s12, 1
      // Predicated region
      $region13: #{prediction_mlp.2} parent=11 // pred_check
        %p163 = pneg %p59
      $region14: #{prediction_mlp.2} parent=11 // pred_check_branch
        %165 = sbr.rel (%p163) target = $region16
      $region15: #{prediction_mlp.2} parent=11 // pred_region
        _
      $region16: #{prediction_mlp.2} parent=11 // pred_fallthru
        _
      // Predicated region
      $region17: #{prediction_mlp.2} parent=11 // pred_check
        %p166 = pneg %p80
      $region18: #{prediction_mlp.2} parent=11 // pred_check_branch
        %168 = sbr.rel (%p166) target = $region20
      $region19: #{prediction_mlp.2} parent=11 // pred_region
        _
      $region20: #{prediction_mlp.2} parent=11 // pred_fallthru
        _
    $region12: #{prediction_mlp.2} parent=5 // pred_fallthru
      _
    %p169 = scmp.lt.s32.totalorder %s12, 2
    // Predicated region
    $region21: #{prediction_mlp.2} parent=5 // pred_check
      %p170 = pneg %p169
    $region22: #{prediction_mlp.2} parent=5 // pred_check_branch
      %172 = sbr.rel (%p170) target = $region24
    $region23: #{prediction_mlp.2} parent=5 // pred_region
      // Predicated region
      $region25: #{prediction_mlp.2} parent=23 // pred_check
        %p173 = pneg %p32
      $region26: #{prediction_mlp.2} parent=23 // pred_check_branch
        %175 = sbr.rel (%p173) target = $region28
      $region27: #{prediction_mlp.2} parent=23 // pred_region
        %s176 = smul.u32 4, %s12
        %p177 = scmp.lt.s32.totalorder %s176, 7
        %s178 = scalar_select %p177, %s176, 7
        %s179 = smul.addr %s178, 4
        %s180 = scalar_lea.vmem %s0, %s179
        %s181 = smul.u32 4, %s12
      $region28: #{prediction_mlp.2} parent=23 // pred_fallthru
        _
    $region24: #{prediction_mlp.2} parent=5 // pred_fallthru
      _
    %p182 = scmp.le.s32.totalorder 1, %s12
    %p183 = scmp.lt.s32.totalorder %s12, 3
    %p184 = pnand %p182, %p183
    %p185 = pneg %p184
    // Predicated region
    $region29: #{prediction_mlp.2} parent=5 // pred_check
      _
    $region30: #{prediction_mlp.2} parent=5 // pred_check_branch
      %187 = sbr.rel (%p184) target = $region32
    $region31: #{prediction_mlp.2} parent=5 // pred_region
      %s188 = ssub.s32 %s12, 1
      %s189 = smul.u32 4, %s17
      %p190 = scmp.lt.s32.totalorder %s189, 7
      %s191 = scalar_select %p190, %s189, 7
      %s192 = smul.addr %s191, 4
      %s193 = scalar_lea.vmem %s0, %s192
      %p194 = pneg %p38
      %p195 = pneg %p35
      %p196 = pneg %p59
      %p197 = pneg %p56
      %p198 = pneg %p80
      %p199 = pneg %p77
      %p200 = pneg %p106
      %p201 = pneg %p103
      %s202 = smul.u32 4, %s17
      %p203 = scmp.lt.s32.totalorder %s202, 7
      %s204 = scalar_select %p203, %s202, 7
      %s205 = smul.addr %s204, 8
      %s206 = scalar_lea.vmem %s3, %s205
      %p207 = pneg %p127
      %p208 = pneg %p124
      %p209 = pneg %p148
      %p210 = pneg %p145
      %s211 = smul.u32 4, %s17
      %p212 = scmp.lt.s32.totalorder %s211, 7
      %s213 = scalar_select %p212, %s211, 7
      %s214 = smul.addr %s213, 4
      %s215 = scalar_lea.vmem %s0, %s214
      %s216 = smul.u32 4, %s17
      %s217 = smul.u32 4, %s17
      %p218 = scmp.lt.s32.totalorder %s217, 7
      %s219 = scalar_select %p218, %s217, 7
      %s220 = smul.addr %s219, 8
      %s221 = scalar_lea.vmem %s3, %s220
      %s222 = smul.u32 4, %s17
      %p224 = scmp.eq.s32.totalorder %s17, 0
      // Predicated region
      $region33: #{prediction_mlp.2} parent=31 // pred_check
        %p225 = pneg %p224
      $region34: #{prediction_mlp.2} parent=31 // pred_check_branch
        %227 = sbr.rel (%p225) target = $region36
      $region35: #{prediction_mlp.2} parent=31 // pred_region
        %228 = vst [vmem:[%s4] sm:$0x1] 0.0
        %229 = vst [vmem:[%s5] sm:$0x1] 0.0
      $region36: #{prediction_mlp.2} parent=31 // pred_fallthru
        _
      %v230 = vld [vmem:[%s215] sm:$0xf]
      %v231 = vld [vmem:[%s215 + $0x4] sm:$0xf]
      %v232 = vld [vmem:[%s215 + $0x8] sm:$0xf]
      %v233 = vld [vmem:[%s215 + $0xc] sm:$0xf]
      %v234 = vld [vmem:[%s1] sm:$0xf]
      %v235 = vld [vmem:[%s1 + $0x4] sm:$0xf]
      %v236 = vld [vmem:[%s1 + $0x8] sm:$0xf]
      %v237 = vld [vmem:[%s1 + $0xc] sm:$0xf]
      %v238 = vld [vmem:[%s1 + $0x10] sm:$0xf]
      %v239 = vld [vmem:[%s1 + $0x14] sm:$0xf]
      %v240 = vld [vmem:[%s1 + $0x18] sm:$0xf]
      %v241 = vld [vmem:[%s1 + $0x1c] sm:$0xf]
      %v242 = vld [vmem:[%s1 + $0x20] sm:$0xf]
      %v243 = vld [vmem:[%s1 + $0x24] sm:$0xf]
      %v244 = vld [vmem:[%s1 + $0x28] sm:$0xf]
      %v245 = vld [vmem:[%s1 + $0x2c] sm:$0xf]
      %v246 = vld [vmem:[%s1 + $0x30] sm:$0xf]
      %v247 = vld [vmem:[%s1 + $0x34] sm:$0xf]
      %v248 = vld [vmem:[%s1 + $0x38] sm:$0xf]
      %v249 = vld [vmem:[%s1 + $0x3c] sm:$0xf]
      %v250 = vld [vmem:[%s2] sm:$0x1]
      %v252 = vlaneseq
      %v253 = vshrl.u32 %v252, 7
      %v254 = vsub.s32 0, %v253
      %v255 = vrot.slane %v250, %v254
      %v261 = vunpack.c.l.b16 %v230
      %v262 = vunpack.c.l.b16 %v231
      %v263 = vunpack.c.l.b16 %v232
      %v264 = vunpack.c.l.b16 %v233
      %v265 = vpack.c.b16 %v262, %v261
      %v266 = vpack.c.b16 %v264, %v263
      %v285 = vunpack.c.l.b16 %v234
      %v286 = vunpack.c.l.b16 %v235
      %v287 = vunpack.c.l.b16 %v236
      %v288 = vunpack.c.l.b16 %v237
      %v289 = vunpack.c.l.b16 %v238
      %v290 = vunpack.c.l.b16 %v239
      %v291 = vunpack.c.l.b16 %v240
      %v292 = vunpack.c.l.b16 %v241
      %v293 = vunpack.c.l.b16 %v242
      %v294 = vunpack.c.l.b16 %v243
      %v295 = vunpack.c.l.b16 %v244
      %v296 = vunpack.c.l.b16 %v245
      %v297 = vunpack.c.l.b16 %v246
      %v298 = vunpack.c.l.b16 %v247
      %v299 = vunpack.c.l.b16 %v248
      %v300 = vunpack.c.l.b16 %v249
      %v301 = vpack.c.b16 %v286, %v285
      %v302 = vpack.c.b16 %v288, %v287
      %v303 = vpack.c.b16 %v290, %v289
      %v304 = vpack.c.b16 %v292, %v291
      %v305 = vpack.c.b16 %v294, %v293
      %v306 = vpack.c.b16 %v296, %v295
      %v307 = vpack.c.b16 %v298, %v297
      %v308 = vpack.c.b16 %v300, %v299
      %317 = vmatprep.subr.bf16.mxu0 0
      %318 = vmatpush1.bf16.msra.mxu0 %v308
      %319 = vmatprep.subr.bf16.mxu0 0
      %320 = vmatpush1.bf16.msra.mxu0 %v307
      %321 = vmatprep.subr.bf16.mxu0 0
      %322 = vmatpush1.bf16.msra.mxu0 %v306
      %323 = vmatprep.subr.bf16.mxu0 0
      %324 = vmatpush1.bf16.msra.mxu0 %v305
      %325 = vmatprep.subr.bf16.mxu0 0
      %326 = vmatpush1.bf16.msra.mxu0 %v304
      %327 = vmatprep.subr.bf16.mxu0 0
      %328 = vmatpush1.bf16.msra.mxu0 %v303
      %329 = vmatprep.subr.bf16.mxu0 0
      %330 = vmatpush1.bf16.msra.mxu0 %v302
      %331 = vmatprep.subr.bf16.mxu0 0
      %332 = vmatpush1.bf16.msra.mxu0 %v301
      %333 = vmatprep.subr.bf16.mxu0 0
      %334 = vmatpush2.bf16.msra.mxu0 0
      %335 = vmatprep.subr.bf16.mxu0 0
      %336 = vmatpush2.bf16.msra.mxu0 0
      %337 = vmatprep.subr.bf16.mxu0 0
      %338 = vmatpush2.bf16.msra.mxu0 0
      %339 = vmatprep.subr.bf16.mxu0 0
      %340 = vmatpush2.bf16.msra.mxu0 0
      %341 = vmatprep.subr.bf16.mxu0 0
      %342 = vmatpush2.bf16.msra.mxu0 0
      %343 = vmatprep.subr.bf16.mxu0 0
      %344 = vmatpush2.bf16.msra.mxu0 0
      %345 = vmatprep.subr.bf16.mxu0 0
      %346 = vmatpush2.bf16.msra.mxu0 0
      %347 = vmatprep.subr.bf16.mxu0 0
      %348 = vmatpush2.bf16.msra.mxu0 0
      %349 = vmatprep.mubr.bf16.mxu0 0
      %350 = vmatmul.mubr.bf16.gmra.mxu0 %v265
      %v351 = vpop.f32.mrf.mxu0
      %v352 = vadd.f32 %v255, %v351
      %v353 = vpop.f32.mrf.mxu0
      %v354 = vpop.f32.mrf.mxu0
      %v355 = vadd.f32 %v255, %v354
      %v356 = vpop.f32.mrf.mxu0
      %357 = vmatprep.mubr.bf16.mxu0 0
      %358 = vmatmul.mubr.bf16.gmra.mxu0 %v266
      %v359 = vpop.f32.mrf.mxu0
      %v360 = vadd.f32 %v255, %v359
      %v361 = vpop.f32.mrf.mxu0
      %v362 = vpop.f32.mrf.mxu0
      %v363 = vadd.f32 %v255, %v362
      %v364 = vpop.f32.mrf.mxu0
      %365 = vdwg.mxu0
      %366 = vst [vmem:[%s221] sm:$0xff] %v352
      %367 = vst [vmem:[%s221 + $0x8] sm:$0xff] %v355
      %368 = vst [vmem:[%s221 + $0x10] sm:$0xff] %v360
      %369 = vst [vmem:[%s221 + $0x18] sm:$0xff] %v363
      %v370 = vlaneseq
      %v371 = vshrl.u32 %v370, 7
      %v372 = vadd.s32 %v371, 8
      %v373 = vadd.s32 %v371, 16
      %v374 = vadd.s32 %v371, 24
      %s375 = smul.u32 %s17, 32
      %v376 = vstv %s375
      %v377 = vadd.s32 %v371, %v376
      %v378 = vadd.s32 %v372, %v376
      %v379 = vadd.s32 %v373, %v376
      %v380 = vadd.s32 %v374, %v376
      %vm381 = vcmp.lt.s32.totalorder %v377, 50
      %vm382 = vcmp.lt.s32.totalorder %v378, 50
      %vm383 = vcmp.lt.s32.totalorder %v379, 50
      %vm384 = vcmp.lt.s32.totalorder %v380, 50
      %v385 = vsel %vm381, 1, 0
      %v386 = vsel %vm382, 1, 0
      %v387 = vsel %vm383, 1, 0
      %v388 = vsel %vm384, 1, 0
      %vm389 = vcmp.eq.s32.totalorder %v385, 1
      %vm390 = vcmp.eq.s32.totalorder %v386, 1
      %vm391 = vcmp.eq.s32.totalorder %v387, 1
      %vm392 = vcmp.eq.s32.totalorder %v388, 1
      %v393 = vsel %vm389, %v352, 0.0
      %v394 = vsel %vm390, %v355, 0.0
      %v395 = vsel %vm391, %v360, 0.0
      %v396 = vsel %vm392, %v363, 0.0
      %v397 = vld [vmem:[%s4] sm:$0x1]
      %v398 = vadd.f32 %v393, %v394
      %v399 = vadd.f32 %v398, %v395
      %v400 = vadd.f32 %v399, %v396
      %v401 = vrot.slane %v400, 4
      %v402 = vadd.f32 %v400, %v401
      %v403 = vrot.slane %v402, 2
      %v404 = vadd.f32 %v402, %v403
      %v405 = vrot.slane %v404, 1
      %v406 = vadd.f32 %v404, %v405
      %v407 = vadd.f32 %v397, %v406
      %408 = vst [vmem:[%s4] sm:$0x1] %v407
      %v409 = vld [vmem:[%s5] sm:$0x1]
      %v410 = vmul.f32 %v393, %v393
      %v411 = vmul.f32 %v394, %v394
      %v412 = vmul.f32 %v395, %v395
      %v413 = vmul.f32 %v396, %v396
      %v414 = vadd.f32 %v410, %v411
      %v415 = vadd.f32 %v414, %v412
      %v416 = vadd.f32 %v415, %v413
      %v417 = vrot.slane %v416, 4
      %v418 = vadd.f32 %v416, %v417
      %v419 = vrot.slane %v418, 2
      %v420 = vadd.f32 %v418, %v419
      %v421 = vrot.slane %v420, 1
      %v422 = vadd.f32 %v420, %v421
      %v423 = vadd.f32 %v409, %v422
      %424 = vst [vmem:[%s5] sm:$0x1] %v423
      %s425 = smul.u32 4, %s17
      %p426 = scmp.lt.s32.totalorder %s425, 7
      %s427 = scalar_select %p426, %s425, 7
      %s428 = smul.addr %s427, 8
      %s429 = scalar_lea.vmem %s3, %s428
      // Predicated region
      $region37: #{prediction_mlp.2} parent=31 // pred_check
        %p430 = pneg %p103
      $region38: #{prediction_mlp.2} parent=31 // pred_check_branch
        %432 = sbr.rel (%p430) target = $region40
      $region39: #{prediction_mlp.2} parent=31 // pred_region
        %s433 = smul.u32 4, %s17
      $region40: #{prediction_mlp.2} parent=31 // pred_fallthru
        _
      // Predicated region
      $region41: #{prediction_mlp.2} parent=31 // pred_check
        %p434 = pneg %p124
      $region42: #{prediction_mlp.2} parent=31 // pred_check_branch
        %436 = sbr.rel (%p434) target = $region44
      $region43: #{prediction_mlp.2} parent=31 // pred_region
        _
      $region44: #{prediction_mlp.2} parent=31 // pred_fallthru
        _
      // Predicated region
      $region45: #{prediction_mlp.2} parent=31 // pred_check
        %p437 = pneg %p145
      $region46: #{prediction_mlp.2} parent=31 // pred_check_branch
        %439 = sbr.rel (%p437) target = $region48
      $region47: #{prediction_mlp.2} parent=31 // pred_region
        _
      $region48: #{prediction_mlp.2} parent=31 // pred_fallthru
        _
      // Predicated region
      $region49: #{prediction_mlp.2} parent=31 // pred_check
        %p440 = pneg %p124
      $region50: #{prediction_mlp.2} parent=31 // pred_check_branch
        %442 = sbr.rel (%p440) target = $region52
      $region51: #{prediction_mlp.2} parent=31 // pred_region
        _
      $region52: #{prediction_mlp.2} parent=31 // pred_fallthru
        _
      // Predicated region
      $region53: #{prediction_mlp.2} parent=31 // pred_check
        %p443 = pneg %p145
      $region54: #{prediction_mlp.2} parent=31 // pred_check_branch
        %445 = sbr.rel (%p443) target = $region56
      $region55: #{prediction_mlp.2} parent=31 // pred_region
        _
      $region56: #{prediction_mlp.2} parent=31 // pred_fallthru
        _
    $region32: #{prediction_mlp.2} parent=5 // pred_fallthru
      _
    %p446 = scmp.le.s32.totalorder 2, %s12
    // Predicated region
    $region57: #{prediction_mlp.2} parent=5 // pred_check
      %p447 = pneg %p446
    $region58: #{prediction_mlp.2} parent=5 // pred_check_branch
      %449 = sbr.rel (%p447) target = $region60
    $region59: #{prediction_mlp.2} parent=5 // pred_region
      %s450 = ssub.s32 %s12, 2
      // Predicated region
      $region61: #{prediction_mlp.2} parent=59 // pred_check
        %p451 = pneg %p109
      $region62: #{prediction_mlp.2} parent=59 // pred_check_branch
        %453 = sbr.rel (%p451) target = $region64
      $region63: #{prediction_mlp.2} parent=59 // pred_region
        %s454 = smul.u32 4, %s18
        %p455 = scmp.lt.s32.totalorder %s454, 7
        %s456 = scalar_select %p455, %s454, 7
        %s457 = smul.addr %s456, 8
        %s458 = scalar_lea.vmem %s3, %s457
      $region64: #{prediction_mlp.2} parent=59 // pred_fallthru
        _
    $region60: #{prediction_mlp.2} parent=5 // pred_fallthru
      _
  $region6: #{prediction_mlp.2} parent=0 // loop_footer
    %s16 = sadd.s32 1, %s12
  $region7: #{prediction_mlp.2} parent=0 // loop_footer_branch
    %11 = sbr.rel target = $region3
  $region8: #{prediction_mlp.2} parent=0 // loop_exit
    _

</llo_original>
